<compile_context>
chip_gen: v7x
topology: tpu7x:2x2x1
jax: 0.10.0
libtpu: 0.0.40
codegen_flags: <defaults>
</compile_context>

<pallas_src>
import math
import jax
import jax.numpy as jnp
from jax.experimental import pallas as pl
from jax.experimental.pallas import tpu as pltpu


def _round_up(x, m):
    return ((x + m - 1) // m) * m


def _choose_tm(M, tm_req):
    """Pick the M tile: multiple of 8, no larger than needed, >= 2 grid steps
    (so a 2-TensorCore chip like v7x shards the 'parallel' axis across both
    cores), preferring an even step count and a minimal ragged tail."""
    tm = max(8, min(_round_up(tm_req, 8), _round_up(M, 8)))
    if M <= 8:
        return tm
    # At least two grid steps.
    if pl.cdiv(M, tm) < 2:
        tm = max(8, _round_up(pl.cdiv(M, 2), 8))
    g = pl.cdiv(M, tm)
    # Prefer an even number of steps (balanced across 2 cores on v7x).
    if g > 1 and g % 2 == 1:
        tm_even = max(8, _round_up(pl.cdiv(M, g + 1), 8))
        if pl.cdiv(M, tm_even) == g + 1:
            tm, g = tm_even, g + 1
    # Tighten tm so the last block is as full as possible (often exact).
    tm_tight = max(8, _round_up(pl.cdiv(M, g), 8))
    if pl.cdiv(M, tm_tight) == g:
        tm = tm_tight
    return tm


def _patch_embed_kernel(x_ref, w_ref, b_ref, o_ref):
    # x_ref: (tm, K)      patches (compute dtype), K = C*p*p ordered (c, kh, kw)
    #                     to match PyTorch Conv2d weight flattening
    # w_ref: (K, hidden)  projection matrix (transposed conv weight), resident
    # b_ref: (1, hidden)  bias, f32, resident
    # o_ref: (tm, hidden) output tile (out dtype)
    acc = jnp.dot(x_ref[...], w_ref[...], preferred_element_type=jnp.float32)
    o_ref[...] = (acc + b_ref[...]).astype(o_ref.dtype)


def patch_embed(x, weight, bias, patch_size=2, flatten=True, tm=1024,
                compute_dtype=jnp.bfloat16, out_dtype=None):
    """PatchEmbed forward.

    x:      (B, H, W, C)           ('b ny nx c' layout, as the module receives it)
    weight: (hidden, C, p, p)      PyTorch Conv2d weight layout
    bias:   (hidden,)
    compute_dtype: dtype fed to the MXU (accumulation is always f32)
    out_dtype: output dtype; defaults to compute_dtype (explicit contract —
               pass jnp.float32 for exact-PyTorch-style f32 output)
    returns (B, H//p * W//p, hidden) if flatten else (B, H//p, W//p, hidden)
    """
    if out_dtype is None:
        out_dtype = compute_dtype
    B, H, W, C = x.shape
    p = patch_size
    hidden = weight.shape[0]
    assert H % p == 0 and W % p == 0
    Hp, Wp = H // p, W // p
    M = B * Hp * Wp
    K = C * p * p

    # Patchify: (B, Hp, p, Wp, p, C) -> (B, Hp, Wp, C, p, p) -> (M, K).
    # K ordering (C, kh, kw) matches weight.reshape(hidden, -1).
    # Cast to the compute dtype on the input side only — accumulation is f32.
    patches = x.reshape(B, Hp, p, Wp, p, C).transpose(0, 1, 3, 5, 2, 4)
    patches = patches.reshape(M, K).astype(compute_dtype)

    w_mat = weight.reshape(hidden, K).T.astype(compute_dtype)      # (K, hidden)
    b_mat = bias.astype(jnp.float32).reshape(1, hidden)            # (1, hidden)

    tm_eff = _choose_tm(M, tm)
    grid = (pl.cdiv(M, tm_eff),)

    in_bytes = jnp.dtype(compute_dtype).itemsize
    out_bytes = jnp.dtype(out_dtype).itemsize
    cost = pl.CostEstimate(
        flops=2 * M * K * hidden,
        transcendentals=0,
        bytes_accessed=(M * K * in_bytes + K * hidden * in_bytes
                        + hidden * 4 + M * hidden * out_bytes),
    )

    out = pl.pallas_call(
        _patch_embed_kernel,
        out_shape=jax.ShapeDtypeStruct((M, hidden), jnp.dtype(out_dtype)),
        grid_spec=pltpu.PrefetchScalarGridSpec(
            num_scalar_prefetch=0,
            grid=grid,
            in_specs=[
                pl.BlockSpec((tm_eff, K), lambda i: (i, 0)),
                pl.BlockSpec((K, hidden), lambda i: (0, 0)),   # resident weight
                pl.BlockSpec((1, hidden), lambda i: (0, 0)),   # resident bias
            ],
            out_specs=pl.BlockSpec((tm_eff, hidden), lambda i: (i, 0)),
        ),
        compiler_params=pltpu.CompilerParams(
            dimension_semantics=("parallel",),
            vmem_limit_bytes=32 * 1024 * 1024,
            # Let XLA fuse the patchify reshape/transpose/cast into the
            # pallas_call input instead of materializing (M, K) in HBM.
            # TODO(synk): verify fusion in the HLO; if it doesn't fuse, the
            # extra pass is only ~2% of bytes at DiT widths.
            allow_input_fusion=[True, False, False],
        ),
        cost_estimate=cost,
    )(patches, w_mat, b_mat)

    if flatten:
        return out.reshape(B, Hp * Wp, hidden)
    return out.reshape(B, Hp, Wp, hidden)


def init_params(key, in_chans, hidden, patch_size):
    """Xavier-uniform on the flattened conv weight (as in _init_params), zero bias."""
    K = in_chans * patch_size * patch_size
    limit = math.sqrt(6.0 / (hidden + K))
    w = jax.random.uniform(key, (hidden, in_chans, patch_size, patch_size),
                           minval=-limit, maxval=limit, dtype=jnp.float32)
    b = jnp.zeros((hidden,), dtype=jnp.float32)
    return w, b


if __name__ == "__main__":
    key = jax.random.PRNGKey(0)
    kx, kw = jax.random.split(key)

    B, H, W, C = 2, 16, 16, 4
    patch_size = 2
    hidden = 32

    x = jax.random.normal(kx, (B, H, W, C), dtype=jnp.float32)
    weight, bias = init_params(kw, C, hidden, patch_size)

    # Reference (exact PyTorch-equivalent math, f32).
    p = patch_size
    Hp, Wp = H // p, W // p
    r_patches = x.reshape(B, Hp, p, Wp, p, C).transpose(0, 1, 3, 5, 2, 4)
    r_patches = r_patches.reshape(B * Hp * Wp, C * p * p)
    ref = (r_patches @ weight.reshape(hidden, -1).T + bias).reshape(B, Hp * Wp, hidden)

    # 1) f32 compute + f32 output — tight check against the reference.
    out_f32 = patch_embed(x, weight, bias, patch_size=patch_size, flatten=True,
                          compute_dtype=jnp.float32, out_dtype=jnp.float32)
    out_f32 = jax.block_until_ready(out_f32)
    assert out_f32.shape == (B, Hp * Wp, hidden)
    assert out_f32.dtype == jnp.float32
    assert jnp.allclose(out_f32, ref, atol=1e-5, rtol=1e-5)

    # 2) default fast path (bf16 inputs, f32 accumulation, bf16 output) — loose check.
    out_bf16 = patch_embed(x, weight, bias, patch_size=patch_size, flatten=True)
    out_bf16 = jax.block_until_ready(out_bf16)
    assert out_bf16.shape == (B, Hp * Wp, hidden)
    assert out_bf16.dtype == jnp.bfloat16
    assert jnp.allclose(out_bf16.astype(jnp.float32), ref, atol=5e-2, rtol=5e-2)

    # 3) flatten=False path — shape + values (f32 for a tight check).
    out_nf = patch_embed(x, weight, bias, patch_size=patch_size, flatten=False,
                         compute_dtype=jnp.float32, out_dtype=jnp.float32)
    out_nf = jax.block_until_ready(out_nf)
    assert out_nf.shape == (B, Hp, Wp, hidden)
    assert jnp.allclose(out_nf.reshape(B, Hp * Wp, hidden), ref, atol=1e-5, rtol=1e-5)

    print("KERNEL_OK")
</pallas_src>

<mosaic_0001>
module attributes {stable_mosaic.version = 11 : i64} {
  func.func @_patch_embed_kernel(%arg0: i32, %arg1: memref<64x16xf32, #tpu.memory_space<vmem>>, %arg2: memref<16x32xf32, #tpu.memory_space<vmem>>, %arg3: memref<1x32xf32, #tpu.memory_space<vmem>>, %arg4: memref<64x32xf32, #tpu.memory_space<vmem>>) attributes {dimension_semantics = [#tpu.dimension_semantics<parallel>], iteration_bounds = array<i64: 2>, scalar_prefetch = 0 : i64, scratch_operands = 0 : i64, tpu.core_type = #tpu.core_type<tc>, window_params = [{transform_indices = @transform_0, window_bounds = array<i64: 64, 16>}, {pipeline_mode = #tpu.pipeline_mode<synchronous>, transform_indices = @transform_1, window_bounds = array<i64: 16, 32>}, {pipeline_mode = #tpu.pipeline_mode<synchronous>, transform_indices = @transform_2, window_bounds = array<i64: 1, 32>}, {transform_indices = @transform_3, window_bounds = array<i64: 64, 32>}]} {
    %c0 = arith.constant 0 : index
    %c0_0 = arith.constant 0 : index
    %0 = vector.load %arg1[%c0, %c0_0] : memref<64x16xf32, #tpu.memory_space<vmem>>, vector<64x16xf32>
    %c0_1 = arith.constant 0 : index
    %c0_2 = arith.constant 0 : index
    %1 = vector.load %arg2[%c0_1, %c0_2] : memref<16x32xf32, #tpu.memory_space<vmem>>, vector<16x32xf32>
    %cst = arith.constant dense<0.000000e+00> : vector<64x32xf32>
    %2 = tpu.matmul %0, %1, %cst {dimension_numbers = #tpu.dot_dimension_numbers<[1], [0], [0], [1], [0, 0, 1, 1], [], []>} : vector<64x16xf32>, vector<16x32xf32>, vector<64x32xf32> -> vector<64x32xf32>
    %c0_3 = arith.constant 0 : index
    %c0_4 = arith.constant 0 : index
    %3 = vector.load %arg3[%c0_3, %c0_4] : memref<1x32xf32, #tpu.memory_space<vmem>>, vector<1x32xf32>
    %4 = vector.broadcast %3 : vector<1x32xf32> to vector<64x32xf32>
    %5 = arith.addf %2, %4 : vector<64x32xf32>
    %c0_5 = arith.constant 0 : index
    %c0_6 = arith.constant 0 : index
    %6 = vector.load %arg4[%c0_5, %c0_6] : memref<64x32xf32, #tpu.memory_space<vmem>>, vector<64x32xf32>
    tpu.vector_store %arg4[%c0_5, %c0_6], %5 {strides = array<i32>} : memref<64x32xf32, #tpu.memory_space<vmem>>, vector<64x32xf32>,
    return
  }
  func.func @transform_0(%arg0: i32) -> (i32, i32) {
    %c0_i32 = arith.constant 0 : i32
    %c0_i32_0 = arith.constant 0 : i32
    return %arg0, %c0_i32 : i32, i32
  }
  func.func @transform_1(%arg0: i32) -> (i32, i32) {
    %c0_i32 = arith.constant 0 : i32
    %c0_i32_0 = arith.constant 0 : i32
    %c0_i32_1 = arith.constant 0 : i32
    return %c0_i32, %c0_i32_0 : i32, i32
  }
  func.func @transform_2(%arg0: i32) -> (i32, i32) {
    %c0_i32 = arith.constant 0 : i32
    %c0_i32_0 = arith.constant 0 : i32
    %c0_i32_1 = arith.constant 0 : i32
    return %c0_i32, %c0_i32_0 : i32, i32
  }
  func.func @transform_3(%arg0: i32) -> (i32, i32) {
    %c0_i32 = arith.constant 0 : i32
    %c0_i32_0 = arith.constant 0 : i32
    return %arg0, %c0_i32 : i32, i32
  }
}

</mosaic_0001>

<llo_original>
// kernel: tpu_custom_call.1
$region0: #{tpu_custom_call.1}
  #allocation0 [shape = 'u32[]', space=smem, size = 0x4, offset = 0x4, fixed_abs, tag = 'smem constant byte address 0x4 - core index']
  #allocation1 [shape = 'u32[144,128]{1,0:T(1,128)}', space=vmem, size = 0x12000, scoped, tag = 'internal scratch']
  %s0 = inlined_call_operand.vmem [shape: f32[128,16], index: 0, kind: input, shape index: {}]
  %s1 = inlined_call_operand.vmem [shape: f32[16,32], index: 1, kind: input, shape index: {}]
  %s2 = inlined_call_operand.vmem [shape: f32[1,32], index: 2, kind: input, shape index: {}]
  %s3 = inlined_call_operand.vmem [shape: f32[128,32], index: 3, kind: output, shape index: {}]
  %s4 = sld [smem:[#allocation0]]
  $region45: #{tpu_custom_call.1} parent=0
    _
  %s6 = ssub.s32 1, %s4
  %s7 = scalar_select 0, %s6, %s4
  loop: start=0, step=1, limit=4
  $region2: #{tpu_custom_call.1} parent=0 // loop_pre_header
    _
  $region3: #{tpu_custom_call.1} parent=0 // loop_header
    %s9 = sphi 0, %s13
    %p10 = scmp.ge.s32.totalorder %s9, 4
    %s19 = sphi 0, %s21
    %s22 = sphi 0, %s19
    %s23 = sphi 0, %s22
    %s39 = sphi 0, %s23
    %s43 = sphi 0, %s43
    %s45 = sphi 0, %s43
    %s46 = sphi 0, %s45
    %s60 = sphi 0, %s46
    %s64 = sphi 0, %s64
    %s66 = sphi 0, %s64
    %s67 = sphi 0, %s66
    %s81 = sphi 0, %s67
    %s87 = sphi 0, %s89
    %s90 = sphi 0, %s87
    %s91 = sphi 0, %s90
    %s107 = sphi 0, %s91
  $region4: #{tpu_custom_call.1} parent=0 // loop_header_branch
    %12 = sbr.rel (%p10) target = $region8
  $region5: #{tpu_custom_call.1} parent=0 // loop_body
    %s14 = ssub.s32 %s9, 1
    %s15 = ssub.s32 %s9, 2
    %s16 = sadd.s32 %s9, 1
    %s17 = ssub.s32 %s9, %s16
    %p18 = scmp.eq.s32.totalorder %s17, 0
    %s20 = sadd.s32 %s19, 1
    %s21 = scalar_select %p18, %s19, %s20
    %p24 = pneg %p18
    %p25 = scmp.eq.s32.totalorder %s9, 1
    %p26 = por %p24, %p25
    %p27 = scmp.ne.s32.totalorder %s19, %s22
    %p28 = scmp.eq.s32.totalorder %s9, 0
    %p29 = por %p27, %p28
    %p30 = scmp.ne.s32.totalorder %s19, %s22
    %p31 = scmp.eq.s32.totalorder %s14, 1
    %p32 = por %p30, %p31
    %p33 = scmp.ne.s32.totalorder %s22, %s23
    %p34 = scmp.eq.s32.totalorder %s14, 0
    %p35 = por %p33, %p34
    %p36 = scmp.ne.s32.totalorder %s22, %s23
    %p37 = scmp.eq.s32.totalorder %s15, 1
    %p38 = por %p36, %p37
    %p40 = scmp.ne.s32.totalorder %s23, %s39
    %p41 = scmp.eq.s32.totalorder %s15, 0
    %p42 = por %p40, %p41
    %s44 = sadd.s32 %s43, 1
    %p47 = scmp.eq.s32.totalorder %s9, 1
    %p48 = scmp.ne.s32.totalorder %s43, %s45
    %p49 = scmp.eq.s32.totalorder %s9, 0
    %p50 = por %p48, %p49
    %p51 = scmp.ne.s32.totalorder %s43, %s45
    %p52 = scmp.eq.s32.totalorder %s14, 1
    %p53 = por %p51, %p52
    %p54 = scmp.ne.s32.totalorder %s45, %s46
    %p55 = scmp.eq.s32.totalorder %s14, 0
    %p56 = por %p54, %p55
    %p57 = scmp.ne.s32.totalorder %s45, %s46
    %p58 = scmp.eq.s32.totalorder %s15, 1
    %p59 = por %p57, %p58
    %p61 = scmp.ne.s32.totalorder %s46, %s60
    %p62 = scmp.eq.s32.totalorder %s15, 0
    %p63 = por %p61, %p62
    %s65 = sadd.s32 %s64, 1
    %p68 = scmp.eq.s32.totalorder %s9, 1
    %p69 = scmp.ne.s32.totalorder %s64, %s66
    %p70 = scmp.eq.s32.totalorder %s9, 0
    %p71 = por %p69, %p70
    %p72 = scmp.ne.s32.totalorder %s64, %s66
    %p73 = scmp.eq.s32.totalorder %s14, 1
    %p74 = por %p72, %p73
    %p75 = scmp.ne.s32.totalorder %s66, %s67
    %p76 = scmp.eq.s32.totalorder %s14, 0
    %p77 = por %p75, %p76
    %p78 = scmp.ne.s32.totalorder %s66, %s67
    %p79 = scmp.eq.s32.totalorder %s15, 1
    %p80 = por %p78, %p79
    %p82 = scmp.ne.s32.totalorder %s67, %s81
    %p83 = scmp.eq.s32.totalorder %s15, 0
    %p84 = por %p82, %p83
    %s85 = ssub.s32 %s9, %s16
    %p86 = scmp.eq.s32.totalorder %s85, 0
    %s88 = sadd.s32 %s87, 1
    %s89 = scalar_select %p86, %s87, %s88
    %p92 = pneg %p86
    %p93 = scmp.eq.s32.totalorder %s9, 1
    %p94 = por %p92, %p93
    %p95 = scmp.ne.s32.totalorder %s87, %s90
    %p96 = scmp.eq.s32.totalorder %s9, 0
    %p97 = por %p95, %p96
    %p98 = scmp.ne.s32.totalorder %s87, %s90
    %p99 = scmp.eq.s32.totalorder %s14, 1
    %p100 = por %p98, %p99
    %p101 = scmp.ne.s32.totalorder %s90, %s91
    %p102 = scmp.eq.s32.totalorder %s14, 0
    %p103 = por %p101, %p102
    %p104 = scmp.ne.s32.totalorder %s90, %s91
    %p105 = scmp.eq.s32.totalorder %s15, 1
    %p106 = por %p104, %p105
    %p108 = scmp.ne.s32.totalorder %s91, %s107
    %p109 = scmp.eq.s32.totalorder %s15, 0
    %p110 = por %p108, %p109
    %p111 = scmp.le.s32.totalorder 1, %s9
    %p112 = scmp.lt.s32.totalorder %s9, 3
    %p113 = pnand %p111, %p112
    %p114 = pneg %p113
    // Predicated region
    $region9: #{tpu_custom_call.1} parent=5 // pred_check
      _
    $region10: #{tpu_custom_call.1} parent=5 // pred_check_branch
      %116 = sbr.rel (%p113) target = $region12
    $region11: #{tpu_custom_call.1} parent=5 // pred_region
      %s117 = ssub.s32 %s9, 1
      // Predicated region
      $region13: #{tpu_custom_call.1} parent=11 // pred_check
        %p118 = pneg %p56
      $region14: #{tpu_custom_call.1} parent=11 // pred_check_branch
        %120 = sbr.rel (%p118) target = $region16
      $region15: #{tpu_custom_call.1} parent=11 // pred_region
        _
      $region16: #{tpu_custom_call.1} parent=11 // pred_fallthru
        _
      // Predicated region
      $region17: #{tpu_custom_call.1} parent=11 // pred_check
        %p121 = pneg %p77
      $region18: #{tpu_custom_call.1} parent=11 // pred_check_branch
        %123 = sbr.rel (%p121) target = $region20
      $region19: #{tpu_custom_call.1} parent=11 // pred_region
        _
      $region20: #{tpu_custom_call.1} parent=11 // pred_fallthru
        _
    $region12: #{tpu_custom_call.1} parent=5 // pred_fallthru
      _
    %p124 = scmp.lt.s32.totalorder %s9, 2
    // Predicated region
    $region21: #{tpu_custom_call.1} parent=5 // pred_check
      %p125 = pneg %p124
    $region22: #{tpu_custom_call.1} parent=5 // pred_check_branch
      %127 = sbr.rel (%p125) target = $region24
    $region23: #{tpu_custom_call.1} parent=5 // pred_region
      // Predicated region
      $region25: #{tpu_custom_call.1} parent=23 // pred_check
        %p128 = pneg %p29
      $region26: #{tpu_custom_call.1} parent=23 // pred_check_branch
        %130 = sbr.rel (%p128) target = $region28
      $region27: #{tpu_custom_call.1} parent=23 // pred_region
        %s131 = smul.u32 8, %s9
        %p132 = scmp.lt.s32.totalorder %s131, 15
        %s133 = scalar_select %p132, %s131, 15
        %s134 = smul.addr %s133, 8
        %s135 = scalar_lea.vmem %s0, %s134
        %s136 = smul.u32 8, %s9
      $region28: #{tpu_custom_call.1} parent=23 // pred_fallthru
        _
    $region24: #{tpu_custom_call.1} parent=5 // pred_fallthru
      _
    %p137 = scmp.le.s32.totalorder 1, %s9
    %p138 = scmp.lt.s32.totalorder %s9, 3
    %p139 = pnand %p137, %p138
    %p140 = pneg %p139
    // Predicated region
    $region29: #{tpu_custom_call.1} parent=5 // pred_check
      _
    $region30: #{tpu_custom_call.1} parent=5 // pred_check_branch
      %142 = sbr.rel (%p139) target = $region32
    $region31: #{tpu_custom_call.1} parent=5 // pred_region
      %s143 = ssub.s32 %s9, 1
      %s144 = smul.u32 8, %s14
      %p145 = scmp.lt.s32.totalorder %s144, 15
      %s146 = scalar_select %p145, %s144, 15
      %s147 = smul.addr %s146, 8
      %s148 = scalar_lea.vmem %s0, %s147
      %p149 = pneg %p35
      %p150 = pneg %p32
      %p151 = pneg %p56
      %p152 = pneg %p53
      %p153 = pneg %p77
      %p154 = pneg %p74
      %p155 = pneg %p103
      %p156 = pneg %p100
      %s157 = smul.u32 8, %s14
      %p158 = scmp.lt.s32.totalorder %s157, 15
      %s159 = scalar_select %p158, %s157, 15
      %s160 = smul.addr %s159, 8
      %s161 = scalar_lea.vmem %s3, %s160
      %s162 = smul.u32 8, %s14
      %p163 = scmp.lt.s32.totalorder %s162, 15
      %s164 = scalar_select %p163, %s162, 15
      %s165 = smul.addr %s164, 8
      %s166 = scalar_lea.vmem %s0, %s165
      %s167 = smul.u32 8, %s14
      %s168 = smul.u32 8, %s14
      %p169 = scmp.lt.s32.totalorder %s168, 15
      %s170 = scalar_select %p169, %s168, 15
      %s171 = smul.addr %s170, 8
      %s172 = scalar_lea.vmem %s3, %s171
      %s173 = smul.u32 8, %s14
      %v174 = vld [vmem:[%s166] sm:$0xff]
      %v175 = vld [vmem:[%s166 + $0x8] sm:$0xff]
      %v176 = vld [vmem:[%s166 + $0x10] sm:$0xff]
      %v177 = vld [vmem:[%s166 + $0x18] sm:$0xff]
      %v178 = vld [vmem:[%s166 + $0x20] sm:$0xff]
      %v179 = vld [vmem:[%s166 + $0x28] sm:$0xff]
      %v180 = vld [vmem:[%s166 + $0x30] sm:$0xff]
      %v181 = vld [vmem:[%s166 + $0x38] sm:$0xff]
      %v182 = vld [vmem:[%s1] sm:$0xff]
      %v183 = vld [vmem:[%s1 + $0x8] sm:$0xff]
      %v184 = vld [vmem:[%s2] sm:$0x1]
      %v186 = vlaneseq
      %v187 = vshrl.u32 %v186, 7
      %v188 = vsub.s32 0, %v187
      %v189 = vrot.slane %v184, %v188
      %vm191 = vcmask 130048
      %v193 = vsel %vm191, %v174, 0
      %v196 = vsel %vm191, %v175, 0
      %v199 = vsel %vm191, %v176, 0
      %v202 = vsel %vm191, %v177, 0
      %v205 = vsel %vm191, %v178, 0
      %v208 = vsel %vm191, %v179, 0
      %v211 = vsel %vm191, %v180, 0
      %v214 = vsel %vm191, %v181, 0
      %216 = vmatprep.subr.mxu0 0.0
      %217 = vmatpush1.msra.mxu0 %v182
      %218 = vmatprep.subr.mxu0 0.0
      %219 = vmatpush1.msra.mxu0 %v183
      %220 = vmatprep.subr.mxu0 0.0
      %221 = vmatpush1.msra.mxu0 0.0
      %222 = vmatprep.subr.mxu0 0.0
      %223 = vmatpush1.msra.mxu0 0.0
      %224 = vmatprep.subr.mxu0 0.0
      %225 = vmatpush1.msra.mxu0 0.0
      %226 = vmatprep.subr.mxu0 0.0
      %227 = vmatpush1.msra.mxu0 0.0
      %228 = vmatprep.subr.mxu0 0.0
      %229 = vmatpush1.msra.mxu0 0.0
      %230 = vmatprep.subr.mxu0 0.0
      %231 = vmatpush1.msra.mxu0 0.0
      %232 = vmatprep.subr.mxu0 0.0
      %233 = vmatpush1.msra.mxu0 0.0
      %234 = vmatprep.subr.mxu0 0.0
      %235 = vmatpush1.msra.mxu0 0.0
      %236 = vmatprep.subr.mxu0 0.0
      %237 = vmatpush1.msra.mxu0 0.0
      %238 = vmatprep.subr.mxu0 0.0
      %239 = vmatpush1.msra.mxu0 0.0
      %240 = vmatprep.subr.mxu0 0.0
      %241 = vmatpush1.msra.mxu0 0.0
      %242 = vmatprep.subr.mxu0 0.0
      %243 = vmatpush1.msra.mxu0 0.0
      %244 = vmatprep.subr.mxu0 0.0
      %245 = vmatpush1.msra.mxu0 0.0
      %246 = vmatprep.subr.mxu0 0.0
      %247 = vmatpush1.msra.mxu0 0.0
      %248 = vmatprep.subr.mxu0 0.0
      %249 = vmatpush1.msra.mxu0 0.0
      %250 = vmatprep.subr.mxu0 0.0
      %251 = vmatpush1.msra.mxu0 0.0
      %252 = vmatprep.subr.mxu0 0.0
      %253 = vmatpush1.msra.mxu0 0.0
      %254 = vmatprep.subr.mxu0 0.0
      %255 = vmatpush1.msra.mxu0 0.0
      %256 = vmatprep.subr.mxu0 0.0
      %257 = vmatpush1.msra.mxu0 0.0
      %258 = vmatprep.subr.mxu0 0.0
      %259 = vmatpush1.msra.mxu0 0.0
      %260 = vmatprep.subr.mxu0 0.0
      %261 = vmatpush1.msra.mxu0 0.0
      %262 = vmatprep.subr.mxu0 0.0
      %263 = vmatpush1.msra.mxu0 0.0
      %264 = vmatprep.subr.mxu0 0.0
      %265 = vmatpush1.msra.mxu0 0.0
      %266 = vmatprep.subr.mxu0 0.0
      %267 = vmatpush1.msra.mxu0 0.0
      %268 = vmatprep.subr.mxu0 0.0
      %269 = vmatpush1.msra.mxu0 0.0
      %270 = vmatprep.subr.mxu0 0.0
      %271 = vmatpush1.msra.mxu0 0.0
      %272 = vmatprep.subr.mxu0 0.0
      %273 = vmatpush1.msra.mxu0 0.0
      %274 = vmatprep.subr.mxu0 0.0
      %275 = vmatpush1.msra.mxu0 0.0
      %276 = vmatprep.subr.mxu0 0.0
      %277 = vmatpush1.msra.mxu0 0.0
      %278 = vmatprep.subr.mxu0 0.0
      %279 = vmatpush1.msra.mxu0 0.0
      %280 = vmatprep.mubr.f32.mxu0 0.0
      %281 = vmatmul.mubr.f32.gmra.mrb[0].mxu0 %v193
      %v282 = vpop.f32.mrb[0].mxu0
      %v283 = vadd.f32 %v189, %v282
      %v284 = vpop.f32.mrb[0].mxu0
      %285 = vmatprep.mubr.f32.mxu0 0.0
      %286 = vmatmul.mubr.f32.gmra.mrb[0].mxu0 %v196
      %v287 = vpop.f32.mrb[0].mxu0
      %v288 = vadd.f32 %v189, %v287
      %v289 = vpop.f32.mrb[0].mxu0
      %290 = vmatprep.mubr.f32.mxu0 0.0
      %291 = vmatmul.mubr.f32.gmra.mrb[0].mxu0 %v199
      %v292 = vpop.f32.mrb[0].mxu0
      %v293 = vadd.f32 %v189, %v292
      %v294 = vpop.f32.mrb[0].mxu0
      %295 = vmatprep.mubr.f32.mxu0 0.0
      %296 = vmatmul.mubr.f32.gmra.mrb[0].mxu0 %v202
      %v297 = vpop.f32.mrb[0].mxu0
      %v298 = vadd.f32 %v189, %v297
      %v299 = vpop.f32.mrb[0].mxu0
      %300 = vmatprep.mubr.f32.mxu0 0.0
      %301 = vmatmul.mubr.f32.gmra.mrb[0].mxu0 %v205
      %v302 = vpop.f32.mrb[0].mxu0
      %v303 = vadd.f32 %v189, %v302
      %v304 = vpop.f32.mrb[0].mxu0
      %305 = vmatprep.mubr.f32.mxu0 0.0
      %306 = vmatmul.mubr.f32.gmra.mrb[0].mxu0 %v208
      %v307 = vpop.f32.mrb[0].mxu0
      %v308 = vadd.f32 %v189, %v307
      %v309 = vpop.f32.mrb[0].mxu0
      %310 = vmatprep.mubr.f32.mxu0 0.0
      %311 = vmatmul.mubr.f32.gmra.mrb[0].mxu0 %v211
      %v312 = vpop.f32.mrb[0].mxu0
      %v313 = vadd.f32 %v189, %v312
      %v314 = vpop.f32.mrb[0].mxu0
      %315 = vmatprep.mubr.f32.mxu0 0.0
      %316 = vmatmul.mubr.f32.gmra.mrb[0].mxu0 %v214
      %v317 = vpop.f32.mrb[0].mxu0
      %v318 = vadd.f32 %v189, %v317
      %v319 = vpop.f32.mrb[0].mxu0
      %320 = vdwg.mxu0
      %vm321 = vcmask 261120
      %322 = vst.msk [vmem:[%s172] sm:$0xff] %vm321, %v283
      %323 = vst.msk [vmem:[%s172 + $0x8] sm:$0xff] %vm321, %v288
      %324 = vst.msk [vmem:[%s172 + $0x10] sm:$0xff] %vm321, %v293
      %325 = vst.msk [vmem:[%s172 + $0x18] sm:$0xff] %vm321, %v298
      %326 = vst.msk [vmem:[%s172 + $0x20] sm:$0xff] %vm321, %v303
      %327 = vst.msk [vmem:[%s172 + $0x28] sm:$0xff] %vm321, %v308
      %328 = vst.msk [vmem:[%s172 + $0x30] sm:$0xff] %vm321, %v313
      %329 = vst.msk [vmem:[%s172 + $0x38] sm:$0xff] %vm321, %v318
      %s330 = smul.u32 8, %s14
      %p331 = scmp.lt.s32.totalorder %s330, 15
      %s332 = scalar_select %p331, %s330, 15
      %s333 = smul.addr %s332, 8
      %s334 = scalar_lea.vmem %s3, %s333
      // Predicated region
      $region33: #{tpu_custom_call.1} parent=31 // pred_check
        %p335 = pneg %p100
      $region34: #{tpu_custom_call.1} parent=31 // pred_check_branch
        %337 = sbr.rel (%p335) target = $region36
      $region35: #{tpu_custom_call.1} parent=31 // pred_region
        %s338 = smul.u32 8, %s14
      $region36: #{tpu_custom_call.1} parent=31 // pred_fallthru
        _
    $region32: #{tpu_custom_call.1} parent=5 // pred_fallthru
      _
    %p339 = scmp.le.s32.totalorder 2, %s9
    // Predicated region
    $region37: #{tpu_custom_call.1} parent=5 // pred_check
      %p340 = pneg %p339
    $region38: #{tpu_custom_call.1} parent=5 // pred_check_branch
      %342 = sbr.rel (%p340) target = $region40
    $region39: #{tpu_custom_call.1} parent=5 // pred_region
      %s343 = ssub.s32 %s9, 2
      // Predicated region
      $region41: #{tpu_custom_call.1} parent=39 // pred_check
        %p344 = pneg %p106
      $region42: #{tpu_custom_call.1} parent=39 // pred_check_branch
        %346 = sbr.rel (%p344) target = $region44
      $region43: #{tpu_custom_call.1} parent=39 // pred_region
        %s347 = smul.u32 8, %s15
        %p348 = scmp.lt.s32.totalorder %s347, 15
        %s349 = scalar_select %p348, %s347, 15
        %s350 = smul.addr %s349, 8
        %s351 = scalar_lea.vmem %s3, %s350
      $region44: #{tpu_custom_call.1} parent=39 // pred_fallthru
        _
    $region40: #{tpu_custom_call.1} parent=5 // pred_fallthru
      _
  $region6: #{tpu_custom_call.1} parent=0 // loop_footer
    %s13 = sadd.s32 1, %s9
  $region7: #{tpu_custom_call.1} parent=0 // loop_footer_branch
    %8 = sbr.rel target = $region3
  $region8: #{tpu_custom_call.1} parent=0 // loop_exit
    _

</llo_original>
